<compile_context>
chip_gen: v7x
topology: tpu7x:2x2x1
jax: 0.10.0
libtpu: 0.0.40
codegen_flags: <defaults>
</compile_context>

<pallas_src>
import math
import numpy as np
import jax
import jax.numpy as jnp
from jax.experimental import pallas as pl
from jax.experimental.pallas import tpu as pltpu


def _num_derivatives(order: int) -> int:
    s = 0
    for x in range(order):
        s += x + 1
    return s + order


# ---------------------------------------------------------------------------
# Taylor-polynomial derivative solve (plain-JAX glue; runs under no_grad in
# the reference module).
# ---------------------------------------------------------------------------
def _taylor_basis(offsets, order):
    # offsets: (..., k, 2) -> (..., k, num_derivatives)
    dx = offsets[..., 0]
    dy = offsets[..., 1]
    terms = []
    for o in range(1, order + 1):
        for i in range(o + 1):
            coef = 1.0 / (math.factorial(o - i) * math.factorial(i))
            terms.append(coef * (dx ** (o - i)) * (dy ** i))
    return jnp.stack(terms, axis=-1)


def solve_derivatives(vertices, neighbors, vertices_values, neighbors_values,
                      num_derivatives, knn, order, dist):
    # TODO(synk): external module `d.solveDerivatives` is not available; this is a
    # weighted least-squares Taylor-polynomial fit (dist used as per-neighbor weights).
    offsets = neighbors - vertices[:, None, :]                       # (M, k, 2)
    A = _taylor_basis(offsets, order)                                # (M, k, D)
    b = neighbors_values - vertices_values[:, None]                  # (M, k)
    Aw = A * dist[..., None]                                         # weighted rows
    AtA = jnp.einsum('mki,mkj->mij', Aw, A) + 1e-6 * jnp.eye(num_derivatives, dtype=A.dtype)
    Atb = jnp.einsum('mki,mk->mi', Aw, b)
    sol = jnp.linalg.solve(AtA, Atb[..., None])                      # (M, D, 1)
    return sol[..., 0]                                               # (M, D)


# ---------------------------------------------------------------------------
# Pallas kernel: PDELinear (weight contraction over derivatives) + Euler step.
#   out[0, m] = x[0, m] + dt * sum_i w[i] * deriv[i, m]
# deriv_ref: VMEM (D, TM)  — D on sublanes, flattened batch*size on lanes
# x_ref/out_ref: VMEM (1, TM) lane-dense
# w_ref: SMEM (D,) f32 scalars ; dt_ref: SMEM (1,) f32
# ---------------------------------------------------------------------------
def tp_update_kernel(w_ref, dt_ref, deriv_ref, x_ref, out_ref):
    num_d = deriv_ref.shape[0]
    dt = dt_ref[0]
    d = deriv_ref[...]                               # (D, TM), single VMEM load
    # unrolled D-term FMA chain on the VPU (no cross-lane reduce, no MXU)
    du = w_ref[0] * d[0:1, :]                        # (1, TM)
    for i in range(1, num_d):
        du = du + w_ref[i] * d[i:i + 1, :]
    out_ref[...] = x_ref[...] + dt * du


def _choose_tm(M, D, vmem_budget_bytes=4 * 1024 * 1024):
    """Pick a lane-tile size TM that divides M, is a multiple of 128, fits a
    conservative double-buffered VMEM budget (safe for v5e/v6e/v7x scoped
    defaults), and keeps >= 2 grid steps when possible so both TensorCores of
    a dual-core chip get work."""
    if M <= 256 or M % 128 != 0:
        return M                                      # full-array block (small problems)
    # double-buffered: 2 bufs * (D rows deriv + x + out) * TM * 4 bytes
    max_tm = vmem_budget_bytes // (2 * (D + 2) * 4)
    max_tm = max(128, (max_tm // 128) * 128)
    tm = min(M, max_tm)
    if tm >= M:                                       # keep >= 2 grid steps (megacore)
        tm = max(128, (M // 2 // 128) * 128)
    while M % tm != 0:
        tm -= 128
    return tm


def tp_layer_update(derivatives, weight, x, dt):
    """derivatives: (B, size, D) f32; weight: (1, 1, D) f32; x: (B, size) f32."""
    batch, size, D = derivatives.shape
    if weight.shape[1] != 1:
        # TODO(synk): point_wise=True (per-vertex weight) path not implemented in the kernel.
        raise NotImplementedError("Pallas kernel implements the point_wise=False path")

    M = batch * size
    # layout plumbing only: put flattened batch*size on lanes, D on sublanes
    deriv_t = derivatives.reshape(M, D).T.astype(jnp.float32)        # (D, M)
    x2 = x.reshape(1, M)
    w_flat = weight.reshape(D).astype(jnp.float32)                   # D scalars -> SMEM
    dt_arr = jnp.full((1,), dt, dtype=jnp.float32)                   # SMEM (no recompile on dt)

    TM = _choose_tm(M, D)
    grid = (M // TM,)

    out = pl.pallas_call(
        tp_update_kernel,
        out_shape=jax.ShapeDtypeStruct((1, M), x.dtype),
        grid=grid,
        in_specs=[
            pl.BlockSpec(memory_space=pltpu.MemorySpace.SMEM),       # weight (D,)
            pl.BlockSpec(memory_space=pltpu.MemorySpace.SMEM),       # dt (1,)
            pl.BlockSpec((D, TM), lambda m: (0, m)),                 # derivatives (D, M)
            pl.BlockSpec((1, TM), lambda m: (0, m)),                 # x (1, M)
        ],
        out_specs=pl.BlockSpec((1, TM), lambda m: (0, m)),
        compiler_params=pltpu.CompilerParams(dimension_semantics=("parallel",)),
    )(w_flat, dt_arr, deriv_t, x2)
    return out.reshape(batch, size)


# ---------------------------------------------------------------------------
# Full TP_layer forward.
# ---------------------------------------------------------------------------
def tp_layer_forward(x, points, edge_index, dt, dist, weight, *, N, k, order, dim=2):
    batch = x.shape[0]
    size = N * N
    num_deriv = _num_derivatives(order)

    points = points.reshape(batch, size, dim)
    values = x.reshape(batch, size, 1)

    # per-batch gather of neighbor coordinates / features (index_select equivalent)
    knn_points = jax.vmap(lambda p, e: p[e])(points, edge_index)        # (B, size*k, dim)
    knn_features = jax.vmap(lambda v, e: v[e, 0])(values, edge_index)   # (B, size*k)

    derivatives = solve_derivatives(
        vertices=points.reshape(batch * size, dim),
        neighbors=knn_points.reshape(batch * size, k, dim),
        vertices_values=x.reshape(-1),
        neighbors_values=knn_features.reshape(batch * size, k),
        num_derivatives=num_deriv, knn=k, order=order, dist=dist,
    ).reshape(batch, size, num_deriv)

    # hot path in Pallas: weight contraction over derivatives + Euler update
    return tp_layer_update(derivatives, weight, x.reshape(batch, size), dt)


if __name__ == "__main__":
    # small deterministic example
    N = 16                     # grid is N x N
    size = N * N               # 256
    k = 8                      # neighbors
    order = 2                  # TP_order -> num_derivatives = 5
    dim = 2
    batch = 4
    dt = 0.01
    D = _num_derivatives(order)

    key = jax.random.PRNGKey(0)
    kx, kw, kp = jax.random.split(key, 3)

    # vertex values
    x = jax.random.normal(kx, (batch, size), dtype=jnp.float32)

    # regular grid coordinates with a small deterministic jitter
    g = np.stack(np.meshgrid(np.arange(N), np.arange(N), indexing="ij"),
                 axis=-1).reshape(size, dim).astype(np.float32) / N
    jitter = jax.random.uniform(kp, (batch, size, dim), minval=-0.01, maxval=0.01,
                                dtype=jnp.float32)
    points = jnp.asarray(g)[None] + jitter                            # (B, size, dim)

    # k nearest neighbors (excluding self), computed deterministically on host
    pts_np = np.asarray(points)
    edge_list = []
    for b in range(batch):
        d2 = ((pts_np[b][:, None, :] - pts_np[b][None, :, :]) ** 2).sum(-1)
        np.fill_diagonal(d2, np.inf)
        idx = np.argsort(d2, axis=1)[:, :k]                           # (size, k)
        edge_list.append(idx.reshape(-1))
    edge_index = jnp.asarray(np.stack(edge_list, 0), dtype=jnp.int32)  # (B, size*k)

    # per-neighbor weights for the LSQ solve
    dist = jnp.ones((batch * size, k), dtype=jnp.float32)

    # PDELinear weight: point_wise=False -> shape (1, 1, num_derivatives),
    # init uniform(-0.1, 0.1) (matches nn.init.uniform_ bounds)
    weight = jax.random.uniform(kw, (1, 1, D), minval=-0.1, maxval=0.1,
                                dtype=jnp.float32)

    out = tp_layer_forward(x, points, edge_index, dt, dist, weight,
                           N=N, k=k, order=order, dim=dim)
    out = jax.block_until_ready(out)

    # pure-JAX reference for the Pallas-implemented hot path
    deriv_ref = solve_derivatives(
        vertices=points.reshape(batch * size, dim),
        neighbors=jax.vmap(lambda p, e: p[e])(points, edge_index).reshape(batch * size, k, dim),
        vertices_values=x.reshape(-1),
        neighbors_values=jax.vmap(lambda v, e: v[e])(x, edge_index).reshape(batch * size, k),
        num_derivatives=D, knn=k, order=order, dist=dist,
    ).reshape(batch, size, D)
    ref = x + dt * jnp.sum(deriv_ref * weight, axis=-1)

    out_np = np.asarray(out)
    assert out.shape == (batch, size)
    assert np.isfinite(out_np).all()
    np.testing.assert_allclose(out_np, np.asarray(ref), rtol=1e-5, atol=1e-5)

    print("KERNEL_OK")
</pallas_src>

<mosaic_0001>
module attributes {stable_mosaic.version = 11 : i64} {
  func.func @tp_update_kernel(%arg0: i32, %arg1: memref<5xf32, #tpu.memory_space<smem>>, %arg2: memref<1xf32, #tpu.memory_space<smem>>, %arg3: memref<5x512xf32, #tpu.memory_space<vmem>>, %arg4: memref<1x512xf32, #tpu.memory_space<vmem>>, %arg5: memref<1x512xf32, #tpu.memory_space<vmem>>) attributes {dimension_semantics = [#tpu.dimension_semantics<parallel>], iteration_bounds = array<i64: 2>, scalar_prefetch = 0 : i64, scratch_operands = 0 : i64, tpu.core_type = #tpu.core_type<tc>, window_params = [{transform_indices = @transform_0, window_bounds = array<i64: 5>}, {transform_indices = @transform_1, window_bounds = array<i64: 1>}, {transform_indices = @transform_2, window_bounds = array<i64: 5, 512>}, {transform_indices = @transform_3, window_bounds = array<i64: 1, 512>}, {transform_indices = @transform_4, window_bounds = array<i64: 1, 512>}]} {
    %c0 = arith.constant 0 : index
    %0 = memref.load %arg2[%c0] : memref<1xf32, #tpu.memory_space<smem>>
    %c0_0 = arith.constant 0 : index
    %c0_1 = arith.constant 0 : index
    %1 = vector.load %arg3[%c0_0, %c0_1] : memref<5x512xf32, #tpu.memory_space<vmem>>, vector<5x512xf32>
    %c0_2 = arith.constant 0 : index
    %2 = memref.load %arg1[%c0_2] : memref<5xf32, #tpu.memory_space<smem>>
    %3 = vector.extract_strided_slice %1 {offsets = [0, 0], sizes = [1, 512], strides = [1, 1]} : vector<5x512xf32> to vector<1x512xf32>
    %4 = vector.broadcast %2 : f32 to vector<1x512xf32>
    %5 = arith.mulf %4, %3 : vector<1x512xf32>
    %c1 = arith.constant 1 : index
    %6 = memref.load %arg1[%c1] : memref<5xf32, #tpu.memory_space<smem>>
    %7 = vector.extract_strided_slice %1 {offsets = [1, 0], sizes = [1, 512], strides = [1, 1]} : vector<5x512xf32> to vector<1x512xf32>
    %8 = vector.broadcast %6 : f32 to vector<1x512xf32>
    %9 = arith.mulf %8, %7 : vector<1x512xf32>
    %10 = arith.addf %5, %9 : vector<1x512xf32>
    %c2 = arith.constant 2 : index
    %11 = memref.load %arg1[%c2] : memref<5xf32, #tpu.memory_space<smem>>
    %12 = vector.extract_strided_slice %1 {offsets = [2, 0], sizes = [1, 512], strides = [1, 1]} : vector<5x512xf32> to vector<1x512xf32>
    %13 = vector.broadcast %11 : f32 to vector<1x512xf32>
    %14 = arith.mulf %13, %12 : vector<1x512xf32>
    %15 = arith.addf %10, %14 : vector<1x512xf32>
    %c3 = arith.constant 3 : index
    %16 = memref.load %arg1[%c3] : memref<5xf32, #tpu.memory_space<smem>>
    %17 = vector.extract_strided_slice %1 {offsets = [3, 0], sizes = [1, 512], strides = [1, 1]} : vector<5x512xf32> to vector<1x512xf32>
    %18 = vector.broadcast %16 : f32 to vector<1x512xf32>
    %19 = arith.mulf %18, %17 : vector<1x512xf32>
    %20 = arith.addf %15, %19 : vector<1x512xf32>
    %c4 = arith.constant 4 : index
    %21 = memref.load %arg1[%c4] : memref<5xf32, #tpu.memory_space<smem>>
    %22 = vector.extract_strided_slice %1 {offsets = [4, 0], sizes = [1, 512], strides = [1, 1]} : vector<5x512xf32> to vector<1x512xf32>
    %23 = vector.broadcast %21 : f32 to vector<1x512xf32>
    %24 = arith.mulf %23, %22 : vector<1x512xf32>
    %25 = arith.addf %20, %24 : vector<1x512xf32>
    %c0_3 = arith.constant 0 : index
    %c0_4 = arith.constant 0 : index
    %26 = vector.load %arg4[%c0_3, %c0_4] : memref<1x512xf32, #tpu.memory_space<vmem>>, vector<1x512xf32>
    %27 = vector.broadcast %0 : f32 to vector<1x512xf32>
    %28 = arith.mulf %27, %25 : vector<1x512xf32>
    %29 = arith.addf %26, %28 : vector<1x512xf32>
    %c0_5 = arith.constant 0 : index
    %c0_6 = arith.constant 0 : index
    %30 = vector.load %arg5[%c0_5, %c0_6] : memref<1x512xf32, #tpu.memory_space<vmem>>, vector<1x512xf32>
    tpu.vector_store %arg5[%c0_5, %c0_6], %29 {strides = array<i32>} : memref<1x512xf32, #tpu.memory_space<vmem>>, vector<1x512xf32>,
    return
  }
  func.func @transform_0(%arg0: i32) -> i32 {
    %c0_i32 = arith.constant 0 : i32
    %c0_i32_0 = arith.constant 0 : i32
    return %c0_i32 : i32
  }
  func.func @transform_1(%arg0: i32) -> i32 {
    %c0_i32 = arith.constant 0 : i32
    %c0_i32_0 = arith.constant 0 : i32
    return %c0_i32 : i32
  }
  func.func @transform_2(%arg0: i32) -> (i32, i32) {
    %c0_i32 = arith.constant 0 : i32
    %c0_i32_0 = arith.constant 0 : i32
    return %c0_i32, %arg0 : i32, i32
  }
  func.func @transform_3(%arg0: i32) -> (i32, i32) {
    %c0_i32 = arith.constant 0 : i32
    %c0_i32_0 = arith.constant 0 : i32
    return %c0_i32, %arg0 : i32, i32
  }
  func.func @transform_4(%arg0: i32) -> (i32, i32) {
    %c0_i32 = arith.constant 0 : i32
    %c0_i32_0 = arith.constant 0 : i32
    return %c0_i32, %arg0 : i32, i32
  }
}

</mosaic_0001>

<llo_original>
// kernel: tpu_custom_call.1
$region0: #{tpu_custom_call.1}
  #allocation0 [shape = 'u32[]', space=smem, size = 0x4, offset = 0x4, fixed_abs, tag = 'smem constant byte address 0x4 - core index']
  #allocation1 [shape = 'u32[144,128]{1,0:T(1,128)}', space=vmem, size = 0x12000, scoped, tag = 'internal scratch']
  #allocation2 [shape = 'f32[1]{0:T(128)S(6)}', space=smem, size = 0x200, scoped, tag = 'scoped memory for tpu_custom_call.1']
  %s0 = inlined_call_operand.vmem [shape: f32[5], index: 0, kind: input, shape index: {}]
  %s1 = inlined_call_operand.<no memory space> [shape: f32[1], index: 1, kind: input, shape index: {}]
  %s2 = inlined_call_operand.hbm [shape: f32[5,1024], index: 2, kind: input, shape index: {}]
  %s3 = inlined_call_operand.vmem [shape: f32[1,1024], index: 3, kind: input, shape index: {}]
  %s4 = inlined_call_operand.hbm [shape: f32[1,1024], index: 4, kind: output, shape index: {}]
  %s5 = sld [smem:[#allocation0]]
  $region57: #{tpu_custom_call.1} parent=0
    _
  %s7 = ssub.s32 1, %s5
  %s8 = scalar_select 0, %s7, %s5
  %9 = sst [smem:[#allocation2]] %s1
  $region1: #{tpu_custom_call.1} parent=0
    #allocation3 [shape = 'u8[512]{0}', space=smem, size = 0x200, scoped, tag = 'input window, operand 0, single buffered']
    #allocation4 [shape = 's32[2]{0}', space=sflag, size = 0x8, scoped, tag = 'scoped memory for tpu_custom_call.1']
    #allocation5 [shape = 's32[2]{0}', space=sflag, size = 0x8, scoped, tag = 'scoped memory for tpu_custom_call.1']
    #allocation6 [shape = 's32[2]{0}', space=sflag, size = 0x8, scoped, tag = 'scoped memory for tpu_custom_call.1']
    #allocation7 [shape = 'u8[32768]{0}', space=vmem, size = 0x8000, scoped, tag = 'input window, operand 2']
    #allocation8 [shape = 'u8[4096]{0}', space=vmem, size = 0x1000, scoped, tag = 'output window, operand 0']
    %10 = vsyncpa [#allocation6], 0
    %11 = vsyncpa [#allocation4], 0
    %s12 = scalar_lea.sflag [#allocation4], 1
    %13 = vsyncpa %s12, 0
    %14 = vsyncpa [#allocation5], 0
    %s15 = scalar_lea.sflag [#allocation5], 1
    %16 = vsyncpa %s15, 0
    loop: start=0, step=1, limit=4
    $region2: #{tpu_custom_call.1} parent=1 // loop_pre_header
      _
    $region3: #{tpu_custom_call.1} parent=1 // loop_header
      %s18 = sphi 0, %s22
      %p19 = scmp.ge.s32.totalorder %s18, 4
      %s26 = sphi 0, %s26
      %s28 = sphi 0, %s26
      %s29 = sphi 0, %s28
      %s43 = sphi 0, %s29
      %s47 = sphi 0, %s47
      %s49 = sphi 0, %s47
      %s50 = sphi 0, %s49
      %s64 = sphi 0, %s50
      %s70 = sphi 0, %s72
      %s73 = sphi 0, %s70
      %s74 = sphi 0, %s73
      %s90 = sphi 0, %s74
      %s96 = sphi 0, %s98
      %s99 = sphi 0, %s96
      %s100 = sphi 0, %s99
      %s116 = sphi 0, %s100
      %s122 = sphi 0, %s124
      %s125 = sphi 0, %s122
      %s126 = sphi 0, %s125
      %s142 = sphi 0, %s126
    $region4: #{tpu_custom_call.1} parent=1 // loop_header_branch
      %21 = sbr.rel (%p19) target = $region8
    $region5: #{tpu_custom_call.1} parent=1 // loop_body
      %s23 = ssub.s32 %s18, 1
      %s24 = ssub.s32 %s18, 2
      %s25 = sadd.s32 %s18, 1
      %s27 = sadd.s32 %s26, 1
      %p30 = scmp.eq.s32.totalorder %s18, 1
      %p31 = scmp.ne.s32.totalorder %s26, %s28
      %p32 = scmp.eq.s32.totalorder %s18, 0
      %p33 = por %p31, %p32
      %p34 = scmp.ne.s32.totalorder %s26, %s28
      %p35 = scmp.eq.s32.totalorder %s23, 1
      %p36 = por %p34, %p35
      %p37 = scmp.ne.s32.totalorder %s28, %s29
      %p38 = scmp.eq.s32.totalorder %s23, 0
      %p39 = por %p37, %p38
      %p40 = scmp.ne.s32.totalorder %s28, %s29
      %p41 = scmp.eq.s32.totalorder %s24, 1
      %p42 = por %p40, %p41
      %p44 = scmp.ne.s32.totalorder %s29, %s43
      %p45 = scmp.eq.s32.totalorder %s24, 0
      %p46 = por %p44, %p45
      %s48 = sadd.s32 %s47, 1
      %p51 = scmp.eq.s32.totalorder %s18, 1
      %p52 = scmp.ne.s32.totalorder %s47, %s49
      %p53 = scmp.eq.s32.totalorder %s18, 0
      %p54 = por %p52, %p53
      %p55 = scmp.ne.s32.totalorder %s47, %s49
      %p56 = scmp.eq.s32.totalorder %s23, 1
      %p57 = por %p55, %p56
      %p58 = scmp.ne.s32.totalorder %s49, %s50
      %p59 = scmp.eq.s32.totalorder %s23, 0
      %p60 = por %p58, %p59
      %p61 = scmp.ne.s32.totalorder %s49, %s50
      %p62 = scmp.eq.s32.totalorder %s24, 1
      %p63 = por %p61, %p62
      %p65 = scmp.ne.s32.totalorder %s50, %s64
      %p66 = scmp.eq.s32.totalorder %s24, 0
      %p67 = por %p65, %p66
      %s68 = ssub.s32 %s18, %s25
      %p69 = scmp.eq.s32.totalorder %s68, 0
      %s71 = sadd.s32 %s70, 1
      %s72 = scalar_select %p69, %s70, %s71
      %p75 = pneg %p69
      %p76 = scmp.eq.s32.totalorder %s18, 1
      %p77 = por %p75, %p76
      %p78 = scmp.ne.s32.totalorder %s70, %s73
      %p79 = scmp.eq.s32.totalorder %s18, 0
      %p80 = por %p78, %p79
      %p81 = scmp.ne.s32.totalorder %s70, %s73
      %p82 = scmp.eq.s32.totalorder %s23, 1
      %p83 = por %p81, %p82
      %p84 = scmp.ne.s32.totalorder %s73, %s74
      %p85 = scmp.eq.s32.totalorder %s23, 0
      %p86 = por %p84, %p85
      %p87 = scmp.ne.s32.totalorder %s73, %s74
      %p88 = scmp.eq.s32.totalorder %s24, 1
      %p89 = por %p87, %p88
      %p91 = scmp.ne.s32.totalorder %s74, %s90
      %p92 = scmp.eq.s32.totalorder %s24, 0
      %p93 = por %p91, %p92
      %s94 = ssub.s32 %s18, %s25
      %p95 = scmp.eq.s32.totalorder %s94, 0
      %s97 = sadd.s32 %s96, 1
      %s98 = scalar_select %p95, %s96, %s97
      %p101 = pneg %p95
      %p102 = scmp.eq.s32.totalorder %s18, 1
      %p103 = por %p101, %p102
      %p104 = scmp.ne.s32.totalorder %s96, %s99
      %p105 = scmp.eq.s32.totalorder %s18, 0
      %p106 = por %p104, %p105
      %p107 = scmp.ne.s32.totalorder %s96, %s99
      %p108 = scmp.eq.s32.totalorder %s23, 1
      %p109 = por %p107, %p108
      %p110 = scmp.ne.s32.totalorder %s99, %s100
      %p111 = scmp.eq.s32.totalorder %s23, 0
      %p112 = por %p110, %p111
      %p113 = scmp.ne.s32.totalorder %s99, %s100
      %p114 = scmp.eq.s32.totalorder %s24, 1
      %p115 = por %p113, %p114
      %p117 = scmp.ne.s32.totalorder %s100, %s116
      %p118 = scmp.eq.s32.totalorder %s24, 0
      %p119 = por %p117, %p118
      %s120 = ssub.s32 %s18, %s25
      %p121 = scmp.eq.s32.totalorder %s120, 0
      %s123 = sadd.s32 %s122, 1
      %s124 = scalar_select %p121, %s122, %s123
      %p127 = pneg %p121
      %p128 = scmp.eq.s32.totalorder %s18, 1
      %p129 = por %p127, %p128
      %p130 = scmp.ne.s32.totalorder %s122, %s125
      %p131 = scmp.eq.s32.totalorder %s18, 0
      %p132 = por %p130, %p131
      %p133 = scmp.ne.s32.totalorder %s122, %s125
      %p134 = scmp.eq.s32.totalorder %s23, 1
      %p135 = por %p133, %p134
      %p136 = scmp.ne.s32.totalorder %s125, %s126
      %p137 = scmp.eq.s32.totalorder %s23, 0
      %p138 = por %p136, %p137
      %p139 = scmp.ne.s32.totalorder %s125, %s126
      %p140 = scmp.eq.s32.totalorder %s24, 1
      %p141 = por %p139, %p140
      %p143 = scmp.ne.s32.totalorder %s126, %s142
      %p144 = scmp.eq.s32.totalorder %s24, 0
      %p145 = por %p143, %p144
      %p146 = scmp.le.s32.totalorder 1, %s18
      %p147 = scmp.lt.s32.totalorder %s18, 3
      %p148 = pnand %p146, %p147
      %p149 = pneg %p148
      // Predicated region
      $region9: #{tpu_custom_call.1} parent=5 // pred_check
        _
      $region10: #{tpu_custom_call.1} parent=5 // pred_check_branch
        %151 = sbr.rel (%p148) target = $region12
      $region11: #{tpu_custom_call.1} parent=5 // pred_region
        %s152 = ssub.s32 %s18, 1
        // Predicated region
        $region13: #{tpu_custom_call.1} parent=11 // pred_check
          %p153 = pneg %p39
        $region14: #{tpu_custom_call.1} parent=11 // pred_check_branch
          %155 = sbr.rel (%p153) target = $region16
        $region15: #{tpu_custom_call.1} parent=11 // pred_region
          %s157 = ssub.s32 16, 16
          %158 = vsyncadd [#allocation6], %s157
          %s160 = sshll.u32 %s0, 4
          %s161 = int_to_ptr.vmem [resolvable:$true] %s160
          %163 = dma.vmem_to_smem %s161, 16, [#allocation3], [#allocation6]
        $region16: #{tpu_custom_call.1} parent=11 // pred_fallthru
          _
        // Predicated region
        $region17: #{tpu_custom_call.1} parent=11 // pred_check
          %p164 = pneg %p60
        $region18: #{tpu_custom_call.1} parent=11 // pred_check_branch
          %166 = sbr.rel (%p164) target = $region20
        $region19: #{tpu_custom_call.1} parent=11 // pred_region
          _
        $region20: #{tpu_custom_call.1} parent=11 // pred_fallthru
          _
      $region12: #{tpu_custom_call.1} parent=5 // pred_fallthru
        _
      %p167 = scmp.lt.s32.totalorder %s18, 2
      // Predicated region
      $region21: #{tpu_custom_call.1} parent=5 // pred_check
        %p168 = pneg %p167
      $region22: #{tpu_custom_call.1} parent=5 // pred_check_branch
        %170 = sbr.rel (%p168) target = $region24
      $region23: #{tpu_custom_call.1} parent=5 // pred_region
        // Predicated region
        $region25: #{tpu_custom_call.1} parent=23 // pred_check
          %p171 = pneg %p80
        $region26: #{tpu_custom_call.1} parent=23 // pred_check_branch
          %173 = sbr.rel (%p171) target = $region28
        $region27: #{tpu_custom_call.1} parent=23 // pred_region
          %s174 = sand.u32 %s70, 1
          %s175 = scalar_lea.sflag [#allocation4], %s174
          %s176 = sand.u32 %s70, 1
          %s177 = smul.addr %s176, 32
          %s178 = scalar_lea.vmem [#allocation7], %s177
          %s179 = smul.u32 4, %s18
          %s181 = ssub.s32 512, 512
          %182 = vsyncadd %s175, %s181
          %s183 = smul.addr %s179, 128
          %s184 = scalar_lea.hbm %s2, %s183
          %s186 = sshll.u32 %s178, 4
          %s187 = int_to_ptr.vmem [resolvable:$true] %s186
          %189 = dma.hbm_to_vmem [thread:$0]  %s184, 512, %s187, %s175
        $region28: #{tpu_custom_call.1} parent=23 // pred_fallthru
          _
        // Predicated region
        $region29: #{tpu_custom_call.1} parent=23 // pred_check
          %p190 = pneg %p106
        $region30: #{tpu_custom_call.1} parent=23 // pred_check_branch
          %192 = sbr.rel (%p190) target = $region32
        $region31: #{tpu_custom_call.1} parent=23 // pred_region
          %s193 = smul.u32 4, %s18
          %p194 = scmp.lt.s32.totalorder %s193, 7
          %s195 = scalar_select %p194, %s193, 7
          %s196 = scalar_lea.vmem %s3, %s195
          %s197 = smul.u32 4, %s18
        $region32: #{tpu_custom_call.1} parent=23 // pred_fallthru
          _
      $region24: #{tpu_custom_call.1} parent=5 // pred_fallthru
        _
      %p198 = scmp.le.s32.totalorder 1, %s18
      %p199 = scmp.lt.s32.totalorder %s18, 3
      %p200 = pnand %p198, %p199
      %p201 = pneg %p200
      // Predicated region
      $region33: #{tpu_custom_call.1} parent=5 // pred_check
        _
      $region34: #{tpu_custom_call.1} parent=5 // pred_check_branch
        %203 = sbr.rel (%p200) target = $region36
      $region35: #{tpu_custom_call.1} parent=5 // pred_region
        %s204 = ssub.s32 %s18, 1
        // Predicated region
        $region37: #{tpu_custom_call.1} parent=35 // pred_check
          %p205 = pneg %p39
        $region38: #{tpu_custom_call.1} parent=35 // pred_check_branch
          %207 = sbr.rel (%p205) target = $region40
        $region39: #{tpu_custom_call.1} parent=35 // pred_region
          %208 = dma.done [#allocation6], 16
        $region40: #{tpu_custom_call.1} parent=35 // pred_fallthru
          _
        %s209 = sand.u32 %s73, 1
        %s210 = scalar_lea.sflag [#allocation4], %s209
        %s211 = sand.u32 %s73, 1
        %s212 = smul.addr %s211, 32
        %s213 = scalar_lea.vmem [#allocation7], %s212
        // Predicated region
        $region41: #{tpu_custom_call.1} parent=35 // pred_check
          %p214 = pneg %p86
        $region42: #{tpu_custom_call.1} parent=35 // pred_check_branch
          %216 = sbr.rel (%p214) target = $region44
        $region43: #{tpu_custom_call.1} parent=35 // pred_region
          %217 = dma.done %s210, 512
        $region44: #{tpu_custom_call.1} parent=35 // pred_fallthru
          _
        %218 = sfence
        %p219 = pneg %p39
        %p220 = pneg %p36
        %p221 = pneg %p60
        %p222 = pneg %p57
        %s223 = sand.u32 %s73, 1
        %s224 = scalar_lea.sflag [#allocation4], %s223
        %s225 = sand.u32 %s73, 1
        %s226 = smul.addr %s225, 32
        %s227 = scalar_lea.vmem [#allocation7], %s226
        %p228 = pneg %p86
        %p229 = pneg %p83
        %s230 = smul.u32 4, %s23
        %p231 = scmp.lt.s32.totalorder %s230, 7
        %s232 = scalar_select %p231, %s230, 7
        %s233 = scalar_lea.vmem %s3, %s232
        %p234 = pneg %p112
        %p235 = pneg %p109
        %p236 = pneg %p138
        %p237 = pneg %p135
        %s238 = sand.u32 %s125, 1
        %s239 = scalar_lea.sflag [#allocation5], %s238
        %s240 = sand.u32 %s125, 1
        %s241 = smul.addr %s240, 4
        %s242 = scalar_lea.vmem [#allocation8], %s241
        %s243 = smul.u32 4, %s23
        %s244 = smul.u32 4, %s23
        %p245 = scmp.lt.s32.totalorder %s244, 7
        %s246 = scalar_select %p245, %s244, 7
        %s247 = scalar_lea.vmem %s3, %s246
        %s248 = smul.u32 4, %s23
        %s249 = smul.u32 4, %s23
        %s250 = sld [smem:[#allocation2]]
        %v251 = vld [vmem:[%s213] sm:$0x1f]
        %v252 = vld [vmem:[%s213 + $0x8] sm:$0x1f]
        %v253 = vld [vmem:[%s213 + $0x10] sm:$0x1f]
        %v254 = vld [vmem:[%s213 + $0x18] sm:$0x1f]
        %s255 = sld [smem:[#allocation3]]
        %v256 = vstv %s255
        %v257 = vmul.f32 %v256, %v251
        %v258 = vmul.f32 %v256, %v252
        %v259 = vmul.f32 %v256, %v253
        %v260 = vmul.f32 %v256, %v254
        %s261 = sld [smem:[#allocation3 + $0x1]]
        %v262 = vstv %s261
        %v263 = vmul.f32 %v262, %v251
        %v264 = vmul.f32 %v262, %v252
        %v265 = vmul.f32 %v262, %v253
        %v266 = vmul.f32 %v262, %v254
        %v271 = vrot.slane %v263, 1
        %v272 = vrot.slane %v264, 1
        %v273 = vrot.slane %v265, 1
        %v274 = vrot.slane %v266, 1
        %v279 = vadd.f32 %v257, %v271
        %v280 = vadd.f32 %v258, %v272
        %v281 = vadd.f32 %v259, %v273
        %v282 = vadd.f32 %v260, %v274
        %s283 = sld [smem:[#allocation3 + $0x2]]
        %v284 = vstv %s283
        %v285 = vmul.f32 %v284, %v251
        %v286 = vmul.f32 %v284, %v252
        %v287 = vmul.f32 %v284, %v253
        %v288 = vmul.f32 %v284, %v254
        %v293 = vrot.slane %v285, 2
        %v294 = vrot.slane %v286, 2
        %v295 = vrot.slane %v287, 2
        %v296 = vrot.slane %v288, 2
        %v301 = vadd.f32 %v279, %v293
        %v302 = vadd.f32 %v280, %v294
        %v303 = vadd.f32 %v281, %v295
        %v304 = vadd.f32 %v282, %v296
        %s305 = sld [smem:[#allocation3 + $0x3]]
        %v306 = vstv %s305
        %v307 = vmul.f32 %v306, %v251
        %v308 = vmul.f32 %v306, %v252
        %v309 = vmul.f32 %v306, %v253
        %v310 = vmul.f32 %v306, %v254
        %v315 = vrot.slane %v307, 3
        %v316 = vrot.slane %v308, 3
        %v317 = vrot.slane %v309, 3
        %v318 = vrot.slane %v310, 3
        %v323 = vadd.f32 %v301, %v315
        %v324 = vadd.f32 %v302, %v316
        %v325 = vadd.f32 %v303, %v317
        %v326 = vadd.f32 %v304, %v318
        %s327 = sld [smem:[#allocation3 + $0x4]]
        %v328 = vstv %s327
        %v329 = vmul.f32 %v328, %v251
        %v330 = vmul.f32 %v328, %v252
        %v331 = vmul.f32 %v328, %v253
        %v332 = vmul.f32 %v328, %v254
        %v337 = vrot.slane %v329, 4
        %v338 = vrot.slane %v330, 4
        %v339 = vrot.slane %v331, 4
        %v340 = vrot.slane %v332, 4
        %v345 = vadd.f32 %v323, %v337
        %v346 = vadd.f32 %v324, %v338
        %v347 = vadd.f32 %v325, %v339
        %v348 = vadd.f32 %v326, %v340
        %v349 = vld [vmem:[%s247] sm:$0xf]
        %v350 = vstv %s250
        %v351 = vmul.f32 %v350, %v345
        %v352 = vmul.f32 %v350, %v346
        %v353 = vmul.f32 %v350, %v347
        %v354 = vmul.f32 %v350, %v348
        %v359 = vcombine.low %v351, %v352
        %v360 = vcombine.low %v353, %v354
        %v362 = vunpack.c.l.s4 1966171168
        %v363 = vunpack.c.0.s8 %v362
        %v364 = vlaneseq
        %v365 = vshrl.u32 %v364, 7
        %v366 = vsub.s32 %v363, %v365
        %v367 = vrot.slane %v359, %v366
        %v369 = vunpack.c.l.s4 1966171168
        %v370 = vunpack.c.0.s8 %v369
        %v371 = vlaneseq
        %v372 = vshrl.u32 %v371, 7
        %v373 = vsub.s32 %v370, %v372
        %v374 = vrot.slane %v360, %v373
        %v375 = vcombine.low %v367, %v374
        %v377 = vunpack.c.l.s4 1966171168
        %v378 = vunpack.c.0.s8 %v377
        %v379 = vlaneseq
        %v380 = vshrl.u32 %v379, 7
        %v381 = vsub.s32 %v378, %v380
        %v382 = vrot.slane %v375, %v381
        %v384 = vadd.f32 %v349, %v382
        %v385 = vlaneseq
        %vm386 = vcmp.ge.s32.totalorder %v385, 0
        %vm387 = vcmp.lt.s32.totalorder %v385, 512
        %vm388 = vmand %vm386, %vm387
        %389 = vst.msk [vmem:[%s242] sm:$0xf] %vm388, %v384
        %s390 = sand.u32 %s125, 1
        %s391 = scalar_lea.sflag [#allocation5], %s390
        %s392 = sand.u32 %s125, 1
        %s393 = smul.addr %s392, 4
        %s394 = scalar_lea.vmem [#allocation8], %s393
        // Predicated region
        $region45: #{tpu_custom_call.1} parent=35 // pred_check
          %p395 = pneg %p135
        $region46: #{tpu_custom_call.1} parent=35 // pred_check_branch
          %397 = sbr.rel (%p395) target = $region48
        $region47: #{tpu_custom_call.1} parent=35 // pred_region
          %s398 = smul.u32 4, %s23
          %s400 = ssub.s32 64, 64
          %401 = vsyncadd %s391, %s400
          %s402 = smul.addr %s398, 16
          %s403 = scalar_lea.hbm %s4, %s402
          %s405 = sshll.u32 %s394, 4
          %s406 = int_to_ptr.vmem [resolvable:$true] %s405
          %408 = dma.vmem_to_hbm [thread:$0]  %s406, 64, %s403, %s391
        $region48: #{tpu_custom_call.1} parent=35 // pred_fallthru
          _
      $region36: #{tpu_custom_call.1} parent=5 // pred_fallthru
        _
      %p409 = scmp.le.s32.totalorder 2, %s18
      // Predicated region
      $region49: #{tpu_custom_call.1} parent=5 // pred_check
        %p410 = pneg %p409
      $region50: #{tpu_custom_call.1} parent=5 // pred_check_branch
        %412 = sbr.rel (%p410) target = $region52
      $region51: #{tpu_custom_call.1} parent=5 // pred_region
        %s413 = ssub.s32 %s18, 2
        // Predicated region
        $region53: #{tpu_custom_call.1} parent=51 // pred_check
          %p414 = pneg %p141
        $region54: #{tpu_custom_call.1} parent=51 // pred_check_branch
          %416 = sbr.rel (%p414) target = $region56
        $region55: #{tpu_custom_call.1} parent=51 // pred_region
          %s417 = sand.u32 %s126, 1
          %s418 = scalar_lea.sflag [#allocation5], %s417
          %s419 = sand.u32 %s126, 1
          %s420 = smul.addr %s419, 4
          %s421 = scalar_lea.vmem [#allocation8], %s420
          %422 = dma.done %s418, 64
        $region56: #{tpu_custom_call.1} parent=51 // pred_fallthru
          _
      $region52: #{tpu_custom_call.1} parent=5 // pred_fallthru
        _
    $region6: #{tpu_custom_call.1} parent=1 // loop_footer
      %s22 = sadd.s32 1, %s18
    $region7: #{tpu_custom_call.1} parent=1 // loop_footer_branch
      %17 = sbr.rel target = $region3
    $region8: #{tpu_custom_call.1} parent=1 // loop_exit
      _
    %423 = vsyncpa [#allocation4], 1
    %s424 = scalar_lea.sflag [#allocation4], 1
    %425 = vsyncpa %s424, 1
    %426 = vsyncpa [#allocation5], 1
    %s427 = scalar_lea.sflag [#allocation5], 1
    %428 = vsyncpa %s427, 1
    %429 = vsyncpa [#allocation6], 1
    %s430 = scalar_lea.sflag [#allocation6], 1
    %431 = vsyncpa %s430, 1

</llo_original>
